<compile_context>
chip_gen: v7x
topology: tpu7x:2x2x1
jax: 0.10.0
libtpu: 0.0.40
codegen_flags: <defaults>
</compile_context>

<pallas_src>
import functools

import numpy as np
import jax
import jax.numpy as jnp
from jax.experimental import pallas as pl
from jax.experimental.pallas import tpu as pltpu

# ------------------------------ tiling config ------------------------------ #
TM_MAX = 512                    # aggregation node-row tile cap (A_hat rows)
TK_MAX = 1024                   # A_hat column (reduction) tile cap
LANE = 128                      # feature / class lane padding
XW_RESIDENT_BYTES = 16 * 1024 * 1024   # keep XW VMEM-resident below this size
VMEM_LIMIT = 48 * 1024 * 1024   # generous headroom; actual usage is a few MiB


def _round_up(x, m):
    return (x + m - 1) // m * m


def _pick_row_tile(n):
    """Row tile: multiple of 8, <= TM_MAX, and >=2 row tiles for non-tiny graphs
    (so v7x's second TensorCore gets work via the 'parallel' axis)."""
    if n < 16:
        return _round_up(n, 8)
    return min(TM_MAX, _round_up((n + 1) // 2, 8))


def _pick_col_tile(n):
    return min(TK_MAX, _round_up(n, LANE))


def _pick_divisor_tile(n, candidates=(512, 256, 128, 8)):
    for c in candidates:
        if n % c == 0:
            return c
    return n


# ------------------------------ Pallas kernels ----------------------------- #

def _xw_kernel(x_ref, w_ref, o_ref):
    # XW = X @ W   (computed once per layer; W resident, rows tiled)
    o_ref[...] = jnp.dot(x_ref[...], w_ref[...],
                         preferred_element_type=jnp.float32).astype(o_ref.dtype)


def _make_agg_kernel(tk, max_nnz, activation, xw_resident):
    """out = epilogue(A_hat @ XW + bias), accumulating only nonzero A_hat tiles."""

    def kernel(cid_ref, nnz_ref, a_ref, xw_ref, b_ref, o_ref, acc_ref):
        i = pl.program_id(0)
        k = pl.program_id(1)

        @pl.when(k == 0)
        def _():
            acc_ref[...] = jnp.zeros_like(acc_ref)

        @pl.when(k < nnz_ref[i])          # skip padded (all-zero) schedule slots
        def _():
            if xw_resident:
                c = cid_ref[i * max_nnz + k]
                start = pl.multiple_of(c * tk, tk)
                xw = xw_ref[pl.ds(start, tk), :]
            else:
                xw = xw_ref[...]
            acc_ref[...] += jnp.dot(a_ref[...], xw,
                                    preferred_element_type=jnp.float32)

        @pl.when(k == pl.num_programs(1) - 1)
        def _():
            z = acc_ref[...] + b_ref[...]
            if activation == "relu":
                o_ref[...] = jnp.maximum(z, 0.0).astype(o_ref.dtype)
            else:  # log_softmax over lanes; padded class lanes pre-masked in bias
                m = jnp.max(z, axis=1, keepdims=True)
                lse = jnp.log(jnp.sum(jnp.exp(z - m), axis=1, keepdims=True))
                o_ref[...] = (z - m - lse).astype(o_ref.dtype)

    return kernel


# ------------------------------ kernel wrappers ----------------------------- #

def feature_transform(x, w):
    """XW = X @ W.  x: (NK, Fin_p) bf16, w: (Fin_p, Fout_p) bf16 -> (NK, Fout_p) bf16."""
    nk, fin = x.shape
    fout = w.shape[1]
    tm = _pick_divisor_tile(nk)
    return pl.pallas_call(
        _xw_kernel,
        out_shape=jax.ShapeDtypeStruct((nk, fout), jnp.bfloat16),
        grid_spec=pltpu.PrefetchScalarGridSpec(
            num_scalar_prefetch=0,
            grid=(nk // tm,),
            in_specs=[pl.BlockSpec((tm, fin), lambda i: (i, 0)),
                      pl.BlockSpec((fin, fout), lambda i: (0, 0))],
            out_specs=pl.BlockSpec((tm, fout), lambda i: (i, 0)),
        ),
        compiler_params=pltpu.CompilerParams(
            dimension_semantics=("parallel",),
            vmem_limit_bytes=VMEM_LIMIT),
    )(x, w)


def aggregate(a_hat, xw, bias, col_ids, nnz, max_nnz, *,
              tm, tk, activation, out_dtype):
    """out = epilogue(A_hat @ XW + bias); only nonzero A_hat tiles are visited."""
    nm, nk = a_hat.shape
    fout = xw.shape[1]
    nmt = nm // tm

    # Keep the whole XW resident in VMEM (fetched once) when it fits.
    xw_resident = (xw.size * xw.dtype.itemsize) <= XW_RESIDENT_BYTES

    def a_map(i, k, cid, nnz_):
        return (i, cid[i * max_nnz + k])

    if xw_resident:
        xw_spec = pl.BlockSpec((nk, fout), lambda i, k, cid, nnz_: (0, 0))
    else:
        # TODO(synk): streaming fallback re-fetches the XW tile per nonzero A_hat
        # tile; only used when XW cannot be VMEM-resident (very large graphs).
        xw_spec = pl.BlockSpec((tk, fout),
                               lambda i, k, cid, nnz_: (cid[i * max_nnz + k], 0))

    a_spec_kwargs = {}
    if max_nnz >= 3:
        # Deepen the A_hat pipeline a bit; VMEM footprint stays tiny.
        a_spec_kwargs["pipeline_mode"] = pl.Buffered(3)
    a_spec = pl.BlockSpec((tm, tk), a_map, **a_spec_kwargs)

    kernel = _make_agg_kernel(tk, max_nnz, activation, xw_resident)

    return pl.pallas_call(
        kernel,
        out_shape=jax.ShapeDtypeStruct((nm, fout), out_dtype),
        grid_spec=pltpu.PrefetchScalarGridSpec(
            num_scalar_prefetch=2,
            grid=(nmt, max_nnz),
            in_specs=[a_spec,
                      xw_spec,
                      pl.BlockSpec((1, fout), lambda i, k, cid, nnz_: (0, 0))],
            out_specs=pl.BlockSpec((tm, fout), lambda i, k, cid, nnz_: (i, 0)),
            scratch_shapes=[pltpu.VMEM((tm, fout), jnp.float32)],
        ),
        compiler_params=pltpu.CompilerParams(
            dimension_semantics=("parallel", "arbitrary"),
            vmem_limit_bytes=VMEM_LIMIT),
    )(col_ids, nnz, a_hat, xw, bias)


def _fit_rows(x, rows):
    if x.shape[0] == rows:
        return x
    if x.shape[0] > rows:
        return x[:rows]
    return jnp.pad(x, ((0, rows - x.shape[0]), (0, 0)))


@functools.partial(jax.jit, static_argnames=("tm", "tk", "max_nnz"))
def gcn_forward(a_hat, x, params, col_ids, nnz, *, tm, tk, max_nnz):
    nk = a_hat.shape[1]
    # Layer 1: relu(A_hat @ (X @ W1) + b1)
    xw1 = feature_transform(x, params["w1"])
    h = aggregate(a_hat, xw1, params["b1"], col_ids, nnz, max_nnz,
                  tm=tm, tk=tk, activation="relu", out_dtype=jnp.bfloat16)
    # TODO(synk): F.dropout(x, training=self.training) -> identity in eval mode.
    # Layer 2: log_softmax(A_hat @ (H @ W2) + b2, dim=1)
    hw2 = feature_transform(_fit_rows(h, nk), params["w2"])
    out = aggregate(a_hat, hw2, params["b2_masked"], col_ids, nnz, max_nnz,
                    tm=tm, tk=tk, activation="log_softmax", out_dtype=jnp.float32)
    return out


# ------------------------------ glue (host side) ---------------------------- #

def build_normalized_adjacency(edge_index, num_nodes):
    """A_hat = D^{-1/2} (A + I) D^{-1/2} (PyG gcn_norm, add_remaining_self_loops)."""
    src, dst = edge_index[0], edge_index[1]
    a = jnp.zeros((num_nodes, num_nodes), jnp.float32)
    a = a.at[dst, src].add(1.0)                  # row = target, col = source
    diag = jnp.arange(num_nodes)
    a = a.at[diag, diag].set(jnp.maximum(a[diag, diag], 1.0))  # only missing self-loops
    deg = jnp.sum(a, axis=1)
    d = jnp.where(deg > 0, 1.0 / jnp.sqrt(deg), 0.0)
    return d[:, None] * a * d[None, :]


def pad2d(x, rows, cols):
    out = jnp.zeros((rows, cols), x.dtype)
    return out.at[: x.shape[0], : x.shape[1]].set(x)


def build_tile_schedule(a_hat_padded, tm, tk):
    """Host-side, one-time: per row tile, the list of nonzero A_hat column tiles."""
    a = np.asarray(a_hat_padded)
    nmt = a.shape[0] // tm
    nkt = a.shape[1] // tk
    nz = np.abs(a).reshape(nmt, tm, nkt, tk).sum(axis=(1, 3)) > 0
    nnz = nz.sum(axis=1).astype(np.int32)
    max_nnz = max(int(nnz.max()), 1)
    col_ids = np.zeros((nmt, max_nnz), np.int32)
    for i in range(nmt):
        ids = np.flatnonzero(nz[i]).astype(np.int32)
        col_ids[i, : ids.size] = ids
    return jnp.asarray(col_ids.reshape(-1)), jnp.asarray(nnz), max_nnz


# --------------------------------- driver ----------------------------------- #

if __name__ == "__main__":
    N = 8
    IN_CHANNELS = 16
    HIDDEN_CHANNELS = 32
    OUT_CHANNELS = 4

    key = jax.random.PRNGKey(0)
    k_x, k1, k2 = jax.random.split(key, 3)

    x = jax.random.normal(k_x, (N, IN_CHANNELS), jnp.float32)

    # Small symmetric graph: ring on 8 nodes + two chords, both directions.
    undirected = [(i, (i + 1) % N) for i in range(N)] + [(0, 4), (2, 6)]
    edges = []
    for (u, v) in undirected:
        edges.append((u, v))
        edges.append((v, u))
    edges = sorted(set(edges))
    edge_index = jnp.array(edges, jnp.int32).T   # (2, E)

    def glorot(k, fi, fo):
        lim = jnp.sqrt(6.0 / (fi + fo))
        return jax.random.uniform(k, (fi, fo), jnp.float32, -lim, lim)

    w1 = glorot(k1, IN_CHANNELS, HIDDEN_CHANNELS)
    b1 = jnp.zeros((HIDDEN_CHANNELS,), jnp.float32)
    w2 = glorot(k2, HIDDEN_CHANNELS, OUT_CHANNELS)
    b2 = jnp.zeros((OUT_CHANNELS,), jnp.float32)

    # ---- one-time preprocessing (hoisted out of the forward pass) ----
    tm = _pick_row_tile(N)                       # aggregation row tile
    tk = _pick_col_tile(N)                       # aggregation reduction tile
    NM = _round_up(N, tm)                        # A_hat rows / output rows
    NK = _round_up(N, tk)                        # A_hat cols / XW rows (rectangular pad)
    FIP = _round_up(IN_CHANNELS, LANE)
    HP = _round_up(HIDDEN_CHANNELS, LANE)
    CP = _round_up(OUT_CHANNELS, LANE)

    a_hat = build_normalized_adjacency(edge_index, N)
    a_hat_f32_p = pad2d(a_hat, NM, NK)
    a_hat_p = a_hat_f32_p.astype(jnp.bfloat16)
    # TODO(synk): optional int8 (v5e/v6e) / fp8 (v7x) A_hat quantization not applied.
    col_ids, nnz, max_nnz = build_tile_schedule(a_hat_f32_p, tm, tk)

    x_p = pad2d(x, NK, FIP).astype(jnp.bfloat16)

    class_mask = jnp.where(jnp.arange(CP) < OUT_CHANNELS, 0.0, -1e30)
    class_mask = class_mask.astype(jnp.float32)[None, :]

    params = {
        "w1": pad2d(w1, FIP, HP).astype(jnp.bfloat16),
        "b1": pad2d(b1[None, :], 1, HP),
        "w2": pad2d(w2, HP, CP).astype(jnp.bfloat16),
        # Padded-class-lane mask folded directly into the layer-2 bias.
        "b2_masked": pad2d(b2[None, :], 1, CP) + class_mask,
    }

    out_p = gcn_forward(a_hat_p, x_p, params, col_ids, nnz,
                        tm=tm, tk=tk, max_nnz=max_nnz)
    out_p = jax.block_until_ready(out_p)
    out = out_p[:N, :OUT_CHANNELS]

    # Pure-JAX reference on the same bf16-cast inputs (intermediates also bf16-rounded
    # to mimic the kernel's bf16 HBM round-trips).
    def bf16_round(v):
        return v.astype(jnp.bfloat16).astype(jnp.float32)

    af = a_hat_p[:N, :N].astype(jnp.float32)
    xf = x_p[:N, :IN_CHANNELS].astype(jnp.float32)
    w1f = params["w1"][:IN_CHANNELS, :HIDDEN_CHANNELS].astype(jnp.float32)
    w2f = params["w2"][:HIDDEN_CHANNELS, :OUT_CHANNELS].astype(jnp.float32)
    xw1_ref = bf16_round(xf @ w1f)
    h_ref = bf16_round(jnp.maximum(af @ xw1_ref + b1[None, :], 0.0))
    hw2_ref = bf16_round(h_ref @ w2f)
    ref = jax.nn.log_softmax(af @ hw2_ref + b2[None, :], axis=1)

    assert out.shape == (N, OUT_CHANNELS)
    assert jnp.allclose(jnp.exp(out).sum(axis=1), 1.0, atol=1e-3)
    assert jnp.allclose(out, ref, atol=5e-2, rtol=5e-2)

    print("KERNEL_OK")
</pallas_src>

<mosaic_0001>
module attributes {stable_mosaic.version = 11 : i64} {
  func.func @_xw_kernel(%arg0: i32, %arg1: memref<128x128xbf16, #tpu.memory_space<vmem>>, %arg2: memref<128x128xbf16, #tpu.memory_space<vmem>>, %arg3: memref<128x128xbf16, #tpu.memory_space<vmem>>) attributes {dimension_semantics = [#tpu.dimension_semantics<parallel>], iteration_bounds = array<i64: 1>, scalar_prefetch = 0 : i64, scratch_operands = 0 : i64, tpu.core_type = #tpu.core_type<tc>, window_params = [{transform_indices = @transform_0, window_bounds = array<i64: 128, 128>}, {pipeline_mode = #tpu.pipeline_mode<synchronous>, transform_indices = @transform_1, window_bounds = array<i64: 128, 128>}, {transform_indices = @transform_2, window_bounds = array<i64: 128, 128>}]} {
    %c0 = arith.constant 0 : index
    %c0_0 = arith.constant 0 : index
    %0 = vector.load %arg1[%c0, %c0_0] : memref<128x128xbf16, #tpu.memory_space<vmem>>, vector<128x128xbf16>
    %c0_1 = arith.constant 0 : index
    %c0_2 = arith.constant 0 : index
    %1 = vector.load %arg2[%c0_1, %c0_2] : memref<128x128xbf16, #tpu.memory_space<vmem>>, vector<128x128xbf16>
    %cst = arith.constant dense<0.000000e+00> : vector<128x128xf32>
    %2 = tpu.matmul %0, %1, %cst {dimension_numbers = #tpu.dot_dimension_numbers<[1], [0], [0], [1], [0, 0, 1, 1], [], []>} : vector<128x128xbf16>, vector<128x128xbf16>, vector<128x128xf32> -> vector<128x128xf32>
    %3 = arith.truncf %2 : vector<128x128xf32> to vector<128x128xbf16>
    %c0_3 = arith.constant 0 : index
    %c0_4 = arith.constant 0 : index
    %4 = vector.load %arg3[%c0_3, %c0_4] : memref<128x128xbf16, #tpu.memory_space<vmem>>, vector<128x128xbf16>
    tpu.vector_store %arg3[%c0_3, %c0_4], %3 {strides = array<i32>} : memref<128x128xbf16, #tpu.memory_space<vmem>>, vector<128x128xbf16>,
    return
  }
  func.func @transform_0(%arg0: i32) -> (i32, i32) {
    %c0_i32 = arith.constant 0 : i32
    %c0_i32_0 = arith.constant 0 : i32
    return %arg0, %c0_i32 : i32, i32
  }
  func.func @transform_1(%arg0: i32) -> (i32, i32) {
    %c0_i32 = arith.constant 0 : i32
    %c0_i32_0 = arith.constant 0 : i32
    %c0_i32_1 = arith.constant 0 : i32
    return %c0_i32, %c0_i32_0 : i32, i32
  }
  func.func @transform_2(%arg0: i32) -> (i32, i32) {
    %c0_i32 = arith.constant 0 : i32
    %c0_i32_0 = arith.constant 0 : i32
    return %arg0, %c0_i32 : i32, i32
  }
}

module attributes {stable_mosaic.version = 11 : i64} {
  func.func @_xw_kernel(%arg0: i32, %arg1: memref<128x128xbf16, #tpu.memory_space<vmem>>, %arg2: memref<128x128xbf16, #tpu.memory_space<vmem>>, %arg3: memref<128x128xbf16, #tpu.memory_space<vmem>>) attributes {dimension_semantics = [#tpu.dimension_semantics<parallel>], iteration_bounds = array<i64: 1>, scalar_prefetch = 0 : i64, scratch_operands = 0 : i64, tpu.core_type = #tpu.core_type<tc>, window_params = [{transform_indices = @transform_0, window_bounds = array<i64: 128, 128>}, {pipeline_mode = #tpu.pipeline_mode<synchronous>, transform_indices = @transform_1, window_bounds = array<i64: 128, 128>}, {transform_indices = @transform_2, window_bounds = array<i64: 128, 128>}]} {
    %c0 = arith.constant 0 : index
    %c0_0 = arith.constant 0 : index
    %0 = vector.load %arg1[%c0, %c0_0] : memref<128x128xbf16, #tpu.memory_space<vmem>>, vector<128x128xbf16>
    %c0_1 = arith.constant 0 : index
    %c0_2 = arith.constant 0 : index
    %1 = vector.load %arg2[%c0_1, %c0_2] : memref<128x128xbf16, #tpu.memory_space<vmem>>, vector<128x128xbf16>
    %cst = arith.constant dense<0.000000e+00> : vector<128x128xf32>
    %2 = tpu.matmul %0, %1, %cst {dimension_numbers = #tpu.dot_dimension_numbers<[1], [0], [0], [1], [0, 0, 1, 1], [], []>} : vector<128x128xbf16>, vector<128x128xbf16>, vector<128x128xf32> -> vector<128x128xf32>
    %3 = arith.truncf %2 : vector<128x128xf32> to vector<128x128xbf16>
    %c0_3 = arith.constant 0 : index
    %c0_4 = arith.constant 0 : index
    %4 = vector.load %arg3[%c0_3, %c0_4] : memref<128x128xbf16, #tpu.memory_space<vmem>>, vector<128x128xbf16>
    tpu.vector_store %arg3[%c0_3, %c0_4], %3 {strides = array<i32>} : memref<128x128xbf16, #tpu.memory_space<vmem>>, vector<128x128xbf16>,
    return
  }
  func.func @transform_0(%arg0: i32) -> (i32, i32) {
    %c0_i32 = arith.constant 0 : i32
    %c0_i32_0 = arith.constant 0 : i32
    return %arg0, %c0_i32 : i32, i32
  }
  func.func @transform_1(%arg0: i32) -> (i32, i32) {
    %c0_i32 = arith.constant 0 : i32
    %c0_i32_0 = arith.constant 0 : i32
    %c0_i32_1 = arith.constant 0 : i32
    return %c0_i32, %c0_i32_0 : i32, i32
  }
  func.func @transform_2(%arg0: i32) -> (i32, i32) {
    %c0_i32 = arith.constant 0 : i32
    %c0_i32_0 = arith.constant 0 : i32
    return %arg0, %c0_i32 : i32, i32
  }
}

module attributes {stable_mosaic.version = 11 : i64} {
  func.func @kernel(%arg0: i32, %arg1: i32, %arg2: memref<1xi32, #tpu.memory_space<smem>>, %arg3: memref<1xi32, #tpu.memory_space<smem>>, %arg4: memref<8x128xbf16, #tpu.memory_space<vmem>>, %arg5: memref<128x128xbf16, #tpu.memory_space<vmem>>, %arg6: memref<1x128xf32, #tpu.memory_space<vmem>>, %arg7: memref<8x128xbf16, #tpu.memory_space<vmem>>, %arg8: memref<8x128xf32, #tpu.memory_space<vmem>>) attributes {dimension_semantics = [#tpu.dimension_semantics<parallel>, #tpu.dimension_semantics<arbitrary>], iteration_bounds = array<i64: 1, 1>, scalar_prefetch = 2 : i64, scratch_operands = 1 : i64, tpu.core_type = #tpu.core_type<tc>, window_params = [{transform_indices = @transform_0, window_bounds = array<i64: 8, 128>}, {pipeline_mode = #tpu.pipeline_mode<synchronous>, transform_indices = @transform_1, window_bounds = array<i64: 128, 128>}, {pipeline_mode = #tpu.pipeline_mode<synchronous>, transform_indices = @transform_2, window_bounds = array<i64: 1, 128>}, {transform_indices = @transform_3, window_bounds = array<i64: 8, 128>}]} {
    %c0_i32 = arith.constant 0 : i32
    %0 = arith.cmpi eq, %arg1, %c0_i32 : i32
    %1 = arith.extui %0 : i1 to i32
    %c0_i32_0 = arith.constant 0 : i32
    %2 = arith.cmpi ne, %1, %c0_i32_0 : i32
    scf.if %2 {
      %cst = arith.constant 0.000000e+00 : f32
      %11 = vector.broadcast %cst : f32 to vector<8x128xf32>
      %c0 = arith.constant 0 : index
      %c0_4 = arith.constant 0 : index
      %12 = vector.load %arg8[%c0, %c0_4] : memref<8x128xf32, #tpu.memory_space<vmem>>, vector<8x128xf32>
      tpu.vector_store %arg8[%c0, %c0_4], %11 {strides = array<i32>} : memref<8x128xf32, #tpu.memory_space<vmem>>, vector<8x128xf32>,
    } else {
    }
    %3 = arith.index_cast %arg0 : i32 to index
    %4 = memref.load %arg3[%3] : memref<1xi32, #tpu.memory_space<smem>>
    %5 = arith.cmpi slt, %arg1, %4 : i32
    %6 = arith.extui %5 : i1 to i32
    %c0_i32_1 = arith.constant 0 : i32
    %7 = arith.cmpi ne, %6, %c0_i32_1 : i32
    scf.if %7 {
      %c1_i32 = arith.constant 1 : i32
      %11 = arith.muli %arg0, %c1_i32 : i32
      %12 = arith.addi %11, %arg1 : i32
      %13 = arith.index_cast %12 : i32 to index
      %14 = memref.load %arg2[%13] : memref<1xi32, #tpu.memory_space<smem>>
      %c128_i32 = arith.constant 128 : i32
      %15 = arith.muli %14, %c128_i32 : i32
      %16 = tpu.assume_multiple %15, 128 : i32
      %17 = arith.index_cast %16 : i32 to index
      %c0 = arith.constant 0 : index
      %18 = vector.load %arg5[%17, %c0] : memref<128x128xbf16, #tpu.memory_space<vmem>>, vector<128x128xbf16>
      %c0_4 = arith.constant 0 : index
      %c0_5 = arith.constant 0 : index
      %19 = vector.load %arg8[%c0_4, %c0_5] : memref<8x128xf32, #tpu.memory_space<vmem>>, vector<8x128xf32>
      %c0_6 = arith.constant 0 : index
      %c0_7 = arith.constant 0 : index
      %20 = vector.load %arg4[%c0_6, %c0_7] : memref<8x128xbf16, #tpu.memory_space<vmem>>, vector<8x128xbf16>
      %cst = arith.constant dense<0.000000e+00> : vector<8x128xf32>
      %21 = tpu.matmul %20, %18, %cst {dimension_numbers = #tpu.dot_dimension_numbers<[1], [0], [0], [1], [0, 0, 1, 1], [], []>} : vector<8x128xbf16>, vector<128x128xbf16>, vector<8x128xf32> -> vector<8x128xf32>
      %22 = arith.addf %19, %21 : vector<8x128xf32>
      %c0_8 = arith.constant 0 : index
      %c0_9 = arith.constant 0 : index
      %23 = vector.load %arg8[%c0_8, %c0_9] : memref<8x128xf32, #tpu.memory_space<vmem>>, vector<8x128xf32>
      tpu.vector_store %arg8[%c0_8, %c0_9], %22 {strides = array<i32>} : memref<8x128xf32, #tpu.memory_space<vmem>>, vector<8x128xf32>,
    } else {
    }
    %c0_i32_2 = arith.constant 0 : i32
    %8 = arith.cmpi eq, %arg1, %c0_i32_2 : i32
    %9 = arith.extui %8 : i1 to i32
    %c0_i32_3 = arith.constant 0 : i32
    %10 = arith.cmpi ne, %9, %c0_i32_3 : i32
    scf.if %10 {
      %c0 = arith.constant 0 : index
      %c0_4 = arith.constant 0 : index
      %11 = vector.load %arg8[%c0, %c0_4] : memref<8x128xf32, #tpu.memory_space<vmem>>, vector<8x128xf32>
      %c0_5 = arith.constant 0 : index
      %c0_6 = arith.constant 0 : index
      %12 = vector.load %arg6[%c0_5, %c0_6] : memref<1x128xf32, #tpu.memory_space<vmem>>, vector<1x128xf32>
      %13 = vector.broadcast %12 : vector<1x128xf32> to vector<8x128xf32>
      %14 = arith.addf %11, %13 : vector<8x128xf32>
      %cst = arith.constant 0.000000e+00 : f32
      %15 = vector.broadcast %cst : f32 to vector<8x128xf32>
      %16 = arith.maximumf %14, %15 : vector<8x128xf32>
      %17 = arith.truncf %16 : vector<8x128xf32> to vector<8x128xbf16>
      %c0_7 = arith.constant 0 : index
      %c0_8 = arith.constant 0 : index
      %18 = vector.load %arg7[%c0_7, %c0_8] : memref<8x128xbf16, #tpu.memory_space<vmem>>, vector<8x128xbf16>
      tpu.vector_store %arg7[%c0_7, %c0_8], %17 {strides = array<i32>} : memref<8x128xbf16, #tpu.memory_space<vmem>>, vector<8x128xbf16>,
    } else {
    }
    return
  }
  func.func @transform_0(%arg0: i32, %arg1: i32, %arg2: memref<1xi32, #tpu.memory_space<smem>>, %arg3: memref<1xi32, #tpu.memory_space<smem>>) -> (i32, i32) {
    %c1_i32 = arith.constant 1 : i32
    %0 = arith.muli %arg0, %c1_i32 : i32
    %1 = arith.addi %0, %arg1 : i32
    %2 = arith.index_cast %1 : i32 to index
    %3 = memref.load %arg2[%2] : memref<1xi32, #tpu.memory_space<smem>>
    %c0_i32 = arith.constant 0 : i32
    return %arg0, %3 : i32, i32
  }
  func.func @transform_1(%arg0: i32, %arg1: i32, %arg2: memref<1xi32, #tpu.memory_space<smem>>, %arg3: memref<1xi32, #tpu.memory_space<smem>>) -> (i32, i32) {
    %c0_i32 = arith.constant 0 : i32
    %c0_i32_0 = arith.constant 0 : i32
    %c0_i32_1 = arith.constant 0 : i32
    return %c0_i32, %c0_i32_0 : i32, i32
  }
  func.func @transform_2(%arg0: i32, %arg1: i32, %arg2: memref<1xi32, #tpu.memory_space<smem>>, %arg3: memref<1xi32, #tpu.memory_space<smem>>) -> (i32, i32) {
    %c0_i32 = arith.constant 0 : i32
    %c0_i32_0 = arith.constant 0 : i32
    %c0_i32_1 = arith.constant 0 : i32
    return %c0_i32, %c0_i32_0 : i32, i32
  }
  func.func @transform_3(%arg0: i32, %arg1: i32, %arg2: memref<1xi32, #tpu.memory_space<smem>>, %arg3: memref<1xi32, #tpu.memory_space<smem>>) -> (i32, i32) {
    %c0_i32 = arith.constant 0 : i32
    %c0_i32_0 = arith.constant 0 : i32
    return %arg0, %c0_i32 : i32, i32
  }
}

module attributes {stable_mosaic.version = 11 : i64} {
  func.func @kernel(%arg0: i32, %arg1: i32, %arg2: memref<1xi32, #tpu.memory_space<smem>>, %arg3: memref<1xi32, #tpu.memory_space<smem>>, %arg4: memref<8x128xbf16, #tpu.memory_space<vmem>>, %arg5: memref<128x128xbf16, #tpu.memory_space<vmem>>, %arg6: memref<1x128xf32, #tpu.memory_space<vmem>>, %arg7: memref<8x128xf32, #tpu.memory_space<vmem>>, %arg8: memref<8x128xf32, #tpu.memory_space<vmem>>) attributes {dimension_semantics = [#tpu.dimension_semantics<parallel>, #tpu.dimension_semantics<arbitrary>], iteration_bounds = array<i64: 1, 1>, scalar_prefetch = 2 : i64, scratch_operands = 1 : i64, tpu.core_type = #tpu.core_type<tc>, window_params = [{transform_indices = @transform_0, window_bounds = array<i64: 8, 128>}, {pipeline_mode = #tpu.pipeline_mode<synchronous>, transform_indices = @transform_1, window_bounds = array<i64: 128, 128>}, {pipeline_mode = #tpu.pipeline_mode<synchronous>, transform_indices = @transform_2, window_bounds = array<i64: 1, 128>}, {transform_indices = @transform_3, window_bounds = array<i64: 8, 128>}]} {
    %c0_i32 = arith.constant 0 : i32
    %0 = arith.cmpi eq, %arg1, %c0_i32 : i32
    %1 = arith.extui %0 : i1 to i32
    %c0_i32_0 = arith.constant 0 : i32
    %2 = arith.cmpi ne, %1, %c0_i32_0 : i32
    scf.if %2 {
      %cst = arith.constant 0.000000e+00 : f32
      %11 = vector.broadcast %cst : f32 to vector<8x128xf32>
      %c0 = arith.constant 0 : index
      %c0_4 = arith.constant 0 : index
      %12 = vector.load %arg8[%c0, %c0_4] : memref<8x128xf32, #tpu.memory_space<vmem>>, vector<8x128xf32>
      tpu.vector_store %arg8[%c0, %c0_4], %11 {strides = array<i32>} : memref<8x128xf32, #tpu.memory_space<vmem>>, vector<8x128xf32>,
    } else {
    }
    %3 = arith.index_cast %arg0 : i32 to index
    %4 = memref.load %arg3[%3] : memref<1xi32, #tpu.memory_space<smem>>
    %5 = arith.cmpi slt, %arg1, %4 : i32
    %6 = arith.extui %5 : i1 to i32
    %c0_i32_1 = arith.constant 0 : i32
    %7 = arith.cmpi ne, %6, %c0_i32_1 : i32
    scf.if %7 {
      %c1_i32 = arith.constant 1 : i32
      %11 = arith.muli %arg0, %c1_i32 : i32
      %12 = arith.addi %11, %arg1 : i32
      %13 = arith.index_cast %12 : i32 to index
      %14 = memref.load %arg2[%13] : memref<1xi32, #tpu.memory_space<smem>>
      %c128_i32 = arith.constant 128 : i32
      %15 = arith.muli %14, %c128_i32 : i32
      %16 = tpu.assume_multiple %15, 128 : i32
      %17 = arith.index_cast %16 : i32 to index
      %c0 = arith.constant 0 : index
      %18 = vector.load %arg5[%17, %c0] : memref<128x128xbf16, #tpu.memory_space<vmem>>, vector<128x128xbf16>
      %c0_4 = arith.constant 0 : index
      %c0_5 = arith.constant 0 : index
      %19 = vector.load %arg8[%c0_4, %c0_5] : memref<8x128xf32, #tpu.memory_space<vmem>>, vector<8x128xf32>
      %c0_6 = arith.constant 0 : index
      %c0_7 = arith.constant 0 : index
      %20 = vector.load %arg4[%c0_6, %c0_7] : memref<8x128xbf16, #tpu.memory_space<vmem>>, vector<8x128xbf16>
      %cst = arith.constant dense<0.000000e+00> : vector<8x128xf32>
      %21 = tpu.matmul %20, %18, %cst {dimension_numbers = #tpu.dot_dimension_numbers<[1], [0], [0], [1], [0, 0, 1, 1], [], []>} : vector<8x128xbf16>, vector<128x128xbf16>, vector<8x128xf32> -> vector<8x128xf32>
      %22 = arith.addf %19, %21 : vector<8x128xf32>
      %c0_8 = arith.constant 0 : index
      %c0_9 = arith.constant 0 : index
      %23 = vector.load %arg8[%c0_8, %c0_9] : memref<8x128xf32, #tpu.memory_space<vmem>>, vector<8x128xf32>
      tpu.vector_store %arg8[%c0_8, %c0_9], %22 {strides = array<i32>} : memref<8x128xf32, #tpu.memory_space<vmem>>, vector<8x128xf32>,
    } else {
    }
    %c0_i32_2 = arith.constant 0 : i32
    %8 = arith.cmpi eq, %arg1, %c0_i32_2 : i32
    %9 = arith.extui %8 : i1 to i32
    %c0_i32_3 = arith.constant 0 : i32
    %10 = arith.cmpi ne, %9, %c0_i32_3 : i32
    scf.if %10 {
      %c0 = arith.constant 0 : index
      %c0_4 = arith.constant 0 : index
      %11 = vector.load %arg8[%c0, %c0_4] : memref<8x128xf32, #tpu.memory_space<vmem>>, vector<8x128xf32>
      %c0_5 = arith.constant 0 : index
      %c0_6 = arith.constant 0 : index
      %12 = vector.load %arg6[%c0_5, %c0_6] : memref<1x128xf32, #tpu.memory_space<vmem>>, vector<1x128xf32>
      %13 = vector.broadcast %12 : vector<1x128xf32> to vector<8x128xf32>
      %14 = arith.addf %11, %13 : vector<8x128xf32>
      %cst = arith.constant dense<0xFF800000> : vector<8xf32>
      %15 = vector.multi_reduction <maximumf>, %14, %cst [1] : vector<8x128xf32> to vector<8xf32>
      %16 = vector.shape_cast %15 : vector<8xf32> to vector<8x1xf32>
      %17 = vector.broadcast %16 : vector<8x1xf32> to vector<8x128xf32>
      %18 = arith.subf %14, %17 : vector<8x128xf32>
      %19 = math.exp %18 : vector<8x128xf32>
      %cst_7 = arith.constant dense<0.000000e+00> : vector<8xf32>
      %20 = vector.multi_reduction <add>, %19, %cst_7 [1] : vector<8x128xf32> to vector<8xf32>
      %21 = vector.shape_cast %20 : vector<8xf32> to vector<8x1xf32>
      %22 = math.log %21 : vector<8x1xf32>
      %23 = vector.broadcast %16 : vector<8x1xf32> to vector<8x128xf32>
      %24 = arith.subf %14, %23 : vector<8x128xf32>
      %25 = vector.broadcast %22 : vector<8x1xf32> to vector<8x128xf32>
      %26 = arith.subf %24, %25 : vector<8x128xf32>
      %c0_8 = arith.constant 0 : index
      %c0_9 = arith.constant 0 : index
      %27 = vector.load %arg7[%c0_8, %c0_9] : memref<8x128xf32, #tpu.memory_space<vmem>>, vector<8x128xf32>
      tpu.vector_store %arg7[%c0_8, %c0_9], %26 {strides = array<i32>} : memref<8x128xf32, #tpu.memory_space<vmem>>, vector<8x128xf32>,
    } else {
    }
    return
  }
  func.func @transform_0(%arg0: i32, %arg1: i32, %arg2: memref<1xi32, #tpu.memory_space<smem>>, %arg3: memref<1xi32, #tpu.memory_space<smem>>) -> (i32, i32) {
    %c1_i32 = arith.constant 1 : i32
    %0 = arith.muli %arg0, %c1_i32 : i32
    %1 = arith.addi %0, %arg1 : i32
    %2 = arith.index_cast %1 : i32 to index
    %3 = memref.load %arg2[%2] : memref<1xi32, #tpu.memory_space<smem>>
    %c0_i32 = arith.constant 0 : i32
    return %arg0, %3 : i32, i32
  }
  func.func @transform_1(%arg0: i32, %arg1: i32, %arg2: memref<1xi32, #tpu.memory_space<smem>>, %arg3: memref<1xi32, #tpu.memory_space<smem>>) -> (i32, i32) {
    %c0_i32 = arith.constant 0 : i32
    %c0_i32_0 = arith.constant 0 : i32
    %c0_i32_1 = arith.constant 0 : i32
    return %c0_i32, %c0_i32_0 : i32, i32
  }
  func.func @transform_2(%arg0: i32, %arg1: i32, %arg2: memref<1xi32, #tpu.memory_space<smem>>, %arg3: memref<1xi32, #tpu.memory_space<smem>>) -> (i32, i32) {
    %c0_i32 = arith.constant 0 : i32
    %c0_i32_0 = arith.constant 0 : i32
    %c0_i32_1 = arith.constant 0 : i32
    return %c0_i32, %c0_i32_0 : i32, i32
  }
  func.func @transform_3(%arg0: i32, %arg1: i32, %arg2: memref<1xi32, #tpu.memory_space<smem>>, %arg3: memref<1xi32, #tpu.memory_space<smem>>) -> (i32, i32) {
    %c0_i32 = arith.constant 0 : i32
    %c0_i32_0 = arith.constant 0 : i32
    return %arg0, %c0_i32 : i32, i32
  }
}

</mosaic_0001>

<llo_original>
// kernel: gcn_forward.6
$region0: #{gcn_forward.6}
  #allocation0 [shape = 'u32[]', space=smem, size = 0x4, offset = 0x4, fixed_abs, tag = 'smem constant byte address 0x4 - core index']
  #allocation1 [shape = 'u32[144,128]{1,0:T(1,128)}', space=vmem, size = 0x12000, scoped, tag = 'internal scratch']
  %s0 = inlined_call_operand.vmem [shape: bf16[128,128], index: 0, kind: input, shape index: {}]
  %s1 = inlined_call_operand.vmem [shape: bf16[128,128], index: 1, kind: input, shape index: {}]
  %s2 = inlined_call_operand.vmem [shape: bf16[128,128], index: 2, kind: output, shape index: {}]
  %s3 = sld [smem:[#allocation0]]
  $region18: #{gcn_forward.6} parent=0
    _
  %s5 = ssub.s32 1, %s3
  %s6 = scalar_select 0, %s5, %s3
  // Predicated region
  $region2: #{gcn_forward.6} parent=0 // pred_check
    _
  $region3: #{gcn_forward.6} parent=0 // pred_check_branch
    %8 = sbr.rel (0) target = $region5
  $region4: #{gcn_forward.6} parent=0 // pred_region
    _
  $region5: #{gcn_forward.6} parent=0 // pred_fallthru
    _
  // Predicated region
  $region6: #{gcn_forward.6} parent=0 // pred_check
    _
  $region7: #{gcn_forward.6} parent=0 // pred_check_branch
    %10 = sbr.rel (0) target = $region9
  $region8: #{gcn_forward.6} parent=0 // pred_region
    _
  $region9: #{gcn_forward.6} parent=0 // pred_fallthru
    _
  %v12 = vld [vmem:[%s0] sm:$0xf]
  %v13 = vld [vmem:[%s0 + $0x4] sm:$0xf]
  %v14 = vld [vmem:[%s0 + $0x8] sm:$0xf]
  %v15 = vld [vmem:[%s0 + $0xc] sm:$0xf]
  %v16 = vld [vmem:[%s0 + $0x10] sm:$0xf]
  %v17 = vld [vmem:[%s0 + $0x14] sm:$0xf]
  %v18 = vld [vmem:[%s0 + $0x18] sm:$0xf]
  %v19 = vld [vmem:[%s0 + $0x1c] sm:$0xf]
  %v20 = vld [vmem:[%s0 + $0x20] sm:$0xf]
  %v21 = vld [vmem:[%s0 + $0x24] sm:$0xf]
  %v22 = vld [vmem:[%s0 + $0x28] sm:$0xf]
  %v23 = vld [vmem:[%s0 + $0x2c] sm:$0xf]
  %v24 = vld [vmem:[%s0 + $0x30] sm:$0xf]
  %v25 = vld [vmem:[%s0 + $0x34] sm:$0xf]
  %v26 = vld [vmem:[%s0 + $0x38] sm:$0xf]
  %v27 = vld [vmem:[%s0 + $0x3c] sm:$0xf]
  %v28 = vld [vmem:[%s1] sm:$0xf]
  %v29 = vld [vmem:[%s1 + $0x4] sm:$0xf]
  %v30 = vld [vmem:[%s1 + $0x8] sm:$0xf]
  %v31 = vld [vmem:[%s1 + $0xc] sm:$0xf]
  %v32 = vld [vmem:[%s1 + $0x10] sm:$0xf]
  %v33 = vld [vmem:[%s1 + $0x14] sm:$0xf]
  %v34 = vld [vmem:[%s1 + $0x18] sm:$0xf]
  %v35 = vld [vmem:[%s1 + $0x1c] sm:$0xf]
  %v36 = vld [vmem:[%s1 + $0x20] sm:$0xf]
  %v37 = vld [vmem:[%s1 + $0x24] sm:$0xf]
  %v38 = vld [vmem:[%s1 + $0x28] sm:$0xf]
  %v39 = vld [vmem:[%s1 + $0x2c] sm:$0xf]
  %v40 = vld [vmem:[%s1 + $0x30] sm:$0xf]
  %v41 = vld [vmem:[%s1 + $0x34] sm:$0xf]
  %v42 = vld [vmem:[%s1 + $0x38] sm:$0xf]
  %v43 = vld [vmem:[%s1 + $0x3c] sm:$0xf]
  %v60 = vunpack.c.l.b16 %v12
  %v61 = vunpack.c.l.b16 %v13
  %v62 = vunpack.c.l.b16 %v14
  %v63 = vunpack.c.l.b16 %v15
  %v64 = vunpack.c.l.b16 %v16
  %v65 = vunpack.c.l.b16 %v17
  %v66 = vunpack.c.l.b16 %v18
  %v67 = vunpack.c.l.b16 %v19
  %v68 = vunpack.c.l.b16 %v20
  %v69 = vunpack.c.l.b16 %v21
  %v70 = vunpack.c.l.b16 %v22
  %v71 = vunpack.c.l.b16 %v23
  %v72 = vunpack.c.l.b16 %v24
  %v73 = vunpack.c.l.b16 %v25
  %v74 = vunpack.c.l.b16 %v26
  %v75 = vunpack.c.l.b16 %v27
  %v76 = vpack.c.b16 %v61, %v60
  %v77 = vpack.c.b16 %v63, %v62
  %v78 = vpack.c.b16 %v65, %v64
  %v79 = vpack.c.b16 %v67, %v66
  %v80 = vpack.c.b16 %v69, %v68
  %v81 = vpack.c.b16 %v71, %v70
  %v82 = vpack.c.b16 %v73, %v72
  %v83 = vpack.c.b16 %v75, %v74
  %v108 = vunpack.c.l.b16 %v28
  %v109 = vunpack.c.l.b16 %v29
  %v110 = vunpack.c.l.b16 %v30
  %v111 = vunpack.c.l.b16 %v31
  %v112 = vunpack.c.l.b16 %v32
  %v113 = vunpack.c.l.b16 %v33
  %v114 = vunpack.c.l.b16 %v34
  %v115 = vunpack.c.l.b16 %v35
  %v116 = vunpack.c.l.b16 %v36
  %v117 = vunpack.c.l.b16 %v37
  %v118 = vunpack.c.l.b16 %v38
  %v119 = vunpack.c.l.b16 %v39
  %v120 = vunpack.c.l.b16 %v40
  %v121 = vunpack.c.l.b16 %v41
  %v122 = vunpack.c.l.b16 %v42
  %v123 = vunpack.c.l.b16 %v43
  %v124 = vpack.c.b16 %v109, %v108
  %v125 = vpack.c.b16 %v111, %v110
  %v126 = vpack.c.b16 %v113, %v112
  %v127 = vpack.c.b16 %v115, %v114
  %v128 = vpack.c.b16 %v117, %v116
  %v129 = vpack.c.b16 %v119, %v118
  %v130 = vpack.c.b16 %v121, %v120
  %v131 = vpack.c.b16 %v123, %v122
  %140 = vmatprep.subr.bf16.mxu0 0
  %141 = vmatpush1.bf16.msra.mxu0 %v124
  %142 = vmatprep.subr.bf16.mxu0 0
  %143 = vmatpush1.bf16.msra.mxu0 %v125
  %144 = vmatprep.subr.bf16.mxu0 0
  %145 = vmatpush1.bf16.msra.mxu0 %v126
  %146 = vmatprep.subr.bf16.mxu0 0
  %147 = vmatpush1.bf16.msra.mxu0 %v127
  %148 = vmatprep.subr.bf16.mxu0 0
  %149 = vmatpush1.bf16.msra.mxu0 %v128
  %150 = vmatprep.subr.bf16.mxu0 0
  %151 = vmatpush1.bf16.msra.mxu0 %v129
  %152 = vmatprep.subr.bf16.mxu0 0
  %153 = vmatpush1.bf16.msra.mxu0 %v130
  %154 = vmatprep.subr.bf16.mxu0 0
  %155 = vmatpush1.bf16.msra.mxu0 %v131
  %156 = vmatprep.subr.bf16.mxu0 0
  %157 = vmatpush1.bf16.msra.mxu0 0
  %158 = vmatprep.subr.bf16.mxu0 0
  %159 = vmatpush1.bf16.msra.mxu0 0
  %160 = vmatprep.subr.bf16.mxu0 0
  %161 = vmatpush1.bf16.msra.mxu0 0
  %162 = vmatprep.subr.bf16.mxu0 0
  %163 = vmatpush1.bf16.msra.mxu0 0
  %164 = vmatprep.subr.bf16.mxu0 0
  %165 = vmatpush1.bf16.msra.mxu0 0
  %166 = vmatprep.subr.bf16.mxu0 0
  %167 = vmatpush1.bf16.msra.mxu0 0
  %168 = vmatprep.subr.bf16.mxu0 0
  %169 = vmatpush1.bf16.msra.mxu0 0
  %170 = vmatprep.subr.bf16.mxu0 0
  %171 = vmatpush1.bf16.msra.mxu0 0
  %172 = vmatprep.mubr.bf16.mxu0 0
  %173 = vmatmul.mubr.bf16.gmra.mrb[0].mxu0 %v76
  %v174 = vpop.f32.mrb[0].mxu0
  %v175 = vadd.f32 0.0, %v174
  %v176 = vpop.f32.mrb[0].mxu0
  %v177 = vpop.f32.mrb[0].mxu0
  %v178 = vadd.f32 0.0, %v177
  %v179 = vpop.f32.mrb[0].mxu0
  %180 = vmatprep.mubr.bf16.mxu0 0
  %181 = vmatmul.mubr.bf16.gmra.mrb[0].mxu0 %v77
  %v182 = vpop.f32.mrb[0].mxu0
  %v183 = vadd.f32 0.0, %v182
  %v184 = vpop.f32.mrb[0].mxu0
  %v185 = vpop.f32.mrb[0].mxu0
  %v186 = vadd.f32 0.0, %v185
  %v187 = vpop.f32.mrb[0].mxu0
  %188 = vmatprep.mubr.bf16.mxu0 0
  %189 = vmatmul.mubr.bf16.gmra.mrb[0].mxu0 %v78
  %v190 = vpop.f32.mrb[0].mxu0
  %v191 = vadd.f32 0.0, %v190
  %v192 = vpop.f32.mrb[0].mxu0
  %v193 = vpop.f32.mrb[0].mxu0
  %v194 = vadd.f32 0.0, %v193
  %v195 = vpop.f32.mrb[0].mxu0
  %196 = vmatprep.mubr.bf16.mxu0 0
  %197 = vmatmul.mubr.bf16.gmra.mrb[0].mxu0 %v79
  %v198 = vpop.f32.mrb[0].mxu0
  %v199 = vadd.f32 0.0, %v198
  %v200 = vpop.f32.mrb[0].mxu0
  %v201 = vpop.f32.mrb[0].mxu0
  %v202 = vadd.f32 0.0, %v201
  %v203 = vpop.f32.mrb[0].mxu0
  %204 = vmatprep.mubr.bf16.mxu0 0
  %205 = vmatmul.mubr.bf16.gmra.mrb[0].mxu0 %v80
  %v206 = vpop.f32.mrb[0].mxu0
  %v207 = vadd.f32 0.0, %v206
  %v208 = vpop.f32.mrb[0].mxu0
  %v209 = vpop.f32.mrb[0].mxu0
  %v210 = vadd.f32 0.0, %v209
  %v211 = vpop.f32.mrb[0].mxu0
  %212 = vmatprep.mubr.bf16.mxu0 0
  %213 = vmatmul.mubr.bf16.gmra.mrb[0].mxu0 %v81
  %v214 = vpop.f32.mrb[0].mxu0
  %v215 = vadd.f32 0.0, %v214
  %v216 = vpop.f32.mrb[0].mxu0
  %v217 = vpop.f32.mrb[0].mxu0
  %v218 = vadd.f32 0.0, %v217
  %v219 = vpop.f32.mrb[0].mxu0
  %220 = vmatprep.mubr.bf16.mxu0 0
  %221 = vmatmul.mubr.bf16.gmra.mrb[0].mxu0 %v82
  %v222 = vpop.f32.mrb[0].mxu0
  %v223 = vadd.f32 0.0, %v222
  %v224 = vpop.f32.mrb[0].mxu0
  %v225 = vpop.f32.mrb[0].mxu0
  %v226 = vadd.f32 0.0, %v225
  %v227 = vpop.f32.mrb[0].mxu0
  %228 = vmatprep.mubr.bf16.mxu0 0
  %229 = vmatmul.mubr.bf16.gmra.mrb[0].mxu0 %v83
  %v230 = vpop.f32.mrb[0].mxu0
  %v231 = vadd.f32 0.0, %v230
  %v232 = vpop.f32.mrb[0].mxu0
  %v233 = vpop.f32.mrb[0].mxu0
  %v234 = vadd.f32 0.0, %v233
  %v235 = vpop.f32.mrb[0].mxu0
  %236 = vdwg.mxu0
  %v237 = vpack.c.bf16 %v178, %v175
  %v238 = vpack.c.bf16 %v186, %v183
  %v239 = vpack.c.bf16 %v194, %v191
  %v240 = vpack.c.bf16 %v202, %v199
  %v241 = vpack.c.bf16 %v210, %v207
  %v242 = vpack.c.bf16 %v218, %v215
  %v243 = vpack.c.bf16 %v226, %v223
  %v244 = vpack.c.bf16 %v234, %v231
  %v253 = vunpack.c.l.b16 %v237
  %v254 = vunpack.c.h.b16 %v237
  %v255 = vunpack.c.l.b16 %v238
  %v256 = vunpack.c.h.b16 %v238
  %v257 = vunpack.c.l.b16 %v239
  %v258 = vunpack.c.h.b16 %v239
  %v259 = vunpack.c.l.b16 %v240
  %v260 = vunpack.c.h.b16 %v240
  %v261 = vunpack.c.l.b16 %v241
  %v262 = vunpack.c.h.b16 %v241
  %v263 = vunpack.c.l.b16 %v242
  %v264 = vunpack.c.h.b16 %v242
  %v265 = vunpack.c.l.b16 %v243
  %v266 = vunpack.c.h.b16 %v243
  %v267 = vunpack.c.l.b16 %v244
  %v268 = vunpack.c.h.b16 %v244
  %v269 = vpack.c.b16 %v253, %v253
  %v270 = vpack.c.b16 %v254, %v254
  %v271 = vpack.c.b16 %v255, %v255
  %v272 = vpack.c.b16 %v256, %v256
  %v273 = vpack.c.b16 %v257, %v257
  %v274 = vpack.c.b16 %v258, %v258
  %v275 = vpack.c.b16 %v259, %v259
  %v276 = vpack.c.b16 %v260, %v260
  %v277 = vpack.c.b16 %v261, %v261
  %v278 = vpack.c.b16 %v262, %v262
  %v279 = vpack.c.b16 %v263, %v263
  %v280 = vpack.c.b16 %v264, %v264
  %v281 = vpack.c.b16 %v265, %v265
  %v282 = vpack.c.b16 %v266, %v266
  %v283 = vpack.c.b16 %v267, %v267
  %v284 = vpack.c.b16 %v268, %v268
  %301 = vst [vmem:[%s2] sm:$0xf] %v269
  %302 = vst [vmem:[%s2 + $0x4] sm:$0xf] %v270
  %303 = vst [vmem:[%s2 + $0x8] sm:$0xf] %v271
  %304 = vst [vmem:[%s2 + $0xc] sm:$0xf] %v272
  %305 = vst [vmem:[%s2 + $0x10] sm:$0xf] %v273
  %306 = vst [vmem:[%s2 + $0x14] sm:$0xf] %v274
  %307 = vst [vmem:[%s2 + $0x18] sm:$0xf] %v275
  %308 = vst [vmem:[%s2 + $0x1c] sm:$0xf] %v276
  %309 = vst [vmem:[%s2 + $0x20] sm:$0xf] %v277
  %310 = vst [vmem:[%s2 + $0x24] sm:$0xf] %v278
  %311 = vst [vmem:[%s2 + $0x28] sm:$0xf] %v279
  %312 = vst [vmem:[%s2 + $0x2c] sm:$0xf] %v280
  %313 = vst [vmem:[%s2 + $0x30] sm:$0xf] %v281
  %314 = vst [vmem:[%s2 + $0x34] sm:$0xf] %v282
  %315 = vst [vmem:[%s2 + $0x38] sm:$0xf] %v283
  %316 = vst [vmem:[%s2 + $0x3c] sm:$0xf] %v284
  // Predicated region
  $region10: #{gcn_forward.6} parent=0 // pred_check
    _
  $region11: #{gcn_forward.6} parent=0 // pred_check_branch
    %318 = sbr.rel (0) target = $region13
  $region12: #{gcn_forward.6} parent=0 // pred_region
    _
  $region13: #{gcn_forward.6} parent=0 // pred_fallthru
    _
  // Predicated region
  $region14: #{gcn_forward.6} parent=0 // pred_check
    _
  $region15: #{gcn_forward.6} parent=0 // pred_check_branch
    %320 = sbr.rel (0) target = $region17
  $region16: #{gcn_forward.6} parent=0 // pred_region
    _
  $region17: #{gcn_forward.6} parent=0 // pred_fallthru
    _

// kernel: gcn_forward.4
$region0: #{gcn_forward.4}
  #allocation0 [shape = 'u32[]', space=smem, size = 0x4, offset = 0x4, fixed_abs, tag = 'smem constant byte address 0x4 - core index']
  #allocation1 [shape = 'u32[144,128]{1,0:T(1,128)}', space=vmem, size = 0x12000, scoped, tag = 'internal scratch']
  %s0 = inlined_call_operand.hbm [shape: bf16[128,128], index: 0, kind: input, shape index: {}]
  %s1 = inlined_call_operand.hbm [shape: bf16[128,128], index: 1, kind: input, shape index: {}]
  %s2 = inlined_call_operand.vmem [shape: bf16[128,128], index: 2, kind: output, shape index: {}]
  %s3 = sld [smem:[#allocation0]]
  $region26: #{gcn_forward.4} parent=0
    _
  %s5 = ssub.s32 1, %s3
  %s6 = scalar_select 0, %s5, %s3
  $region1: #{gcn_forward.4} parent=0
    #allocation2 [shape = 'u8[32768]{0}', space=vmem, size = 0x8000, scoped, tag = 'input window, operand 0, single buffered']
    #allocation3 [shape = 's32[1]{0}', space=sflag, size = 0x4, scoped, tag = 'scoped memory for gcn_forward.4']
    #allocation4 [shape = 'u8[32768]{0}', space=vmem, size = 0x8000, scoped, tag = 'input window, operand 1, single buffered']
    #allocation5 [shape = 's32[1]{0}', space=sflag, size = 0x4, scoped, tag = 'scoped memory for gcn_forward.4']
    %7 = vsyncpa [#allocation3], 0
    %8 = vsyncpa [#allocation5], 0
    // Predicated region
    $region2: #{gcn_forward.4} parent=1 // pred_check
      _
    $region3: #{gcn_forward.4} parent=1 // pred_check_branch
      %10 = sbr.rel (0) target = $region5
    $region4: #{gcn_forward.4} parent=1 // pred_region
      %s12 = ssub.s32 1024, 1024
      %13 = vsyncadd [#allocation3], %s12
      %s14 = sshll.u32 [#allocation2], 4
      %s15 = int_to_ptr.vmem [resolvable:$true] %s14
      %20 = dma.hbm_to_vmem [thread:$0]  %s0, 1024, %s15, [#allocation3], 64, 64, 4
    $region5: #{gcn_forward.4} parent=1 // pred_fallthru
      _
    // Predicated region
    $region6: #{gcn_forward.4} parent=1 // pred_check
      _
    $region7: #{gcn_forward.4} parent=1 // pred_check_branch
      %22 = sbr.rel (0) target = $region9
    $region8: #{gcn_forward.4} parent=1 // pred_region
      %s24 = ssub.s32 1024, 1024
      %25 = vsyncadd [#allocation5], %s24
      %s26 = sshll.u32 [#allocation4], 4
      %s27 = int_to_ptr.vmem [resolvable:$true] %s26
      %32 = dma.hbm_to_vmem [thread:$0]  %s1, 1024, %s27, [#allocation5], 64, 64, 4
    $region9: #{gcn_forward.4} parent=1 // pred_fallthru
      _
    // Predicated region
    $region10: #{gcn_forward.4} parent=1 // pred_check
      _
    $region11: #{gcn_forward.4} parent=1 // pred_check_branch
      %34 = sbr.rel (0) target = $region13
    $region12: #{gcn_forward.4} parent=1 // pred_region
      %35 = dma.done [#allocation3], 1024
    $region13: #{gcn_forward.4} parent=1 // pred_fallthru
      _
    // Predicated region
    $region14: #{gcn_forward.4} parent=1 // pred_check
      _
    $region15: #{gcn_forward.4} parent=1 // pred_check_branch
      %37 = sbr.rel (0) target = $region17
    $region16: #{gcn_forward.4} parent=1 // pred_region
      %38 = dma.done [#allocation5], 1024
    $region17: #{gcn_forward.4} parent=1 // pred_fallthru
      _
    %v40 = vld [vmem:[#allocation2] sm:$0xf]
    %v41 = vld [vmem:[#allocation2 + $0x4] sm:$0xf]
    %v42 = vld [vmem:[#allocation2 + $0x8] sm:$0xf]
    %v43 = vld [vmem:[#allocation2 + $0xc] sm:$0xf]
    %v44 = vld [vmem:[#allocation2 + $0x10] sm:$0xf]
    %v45 = vld [vmem:[#allocation2 + $0x14] sm:$0xf]
    %v46 = vld [vmem:[#allocation2 + $0x18] sm:$0xf]
    %v47 = vld [vmem:[#allocation2 + $0x1c] sm:$0xf]
    %v48 = vld [vmem:[#allocation2 + $0x20] sm:$0xf]
    %v49 = vld [vmem:[#allocation2 + $0x24] sm:$0xf]
    %v50 = vld [vmem:[#allocation2 + $0x28] sm:$0xf]
    %v51 = vld [vmem:[#allocation2 + $0x2c] sm:$0xf]
    %v52 = vld [vmem:[#allocation2 + $0x30] sm:$0xf]
    %v53 = vld [vmem:[#allocation2 + $0x34] sm:$0xf]
    %v54 = vld [vmem:[#allocation2 + $0x38] sm:$0xf]
    %v55 = vld [vmem:[#allocation2 + $0x3c] sm:$0xf]
    %v56 = vld [vmem:[#allocation4] sm:$0xf]
    %v57 = vld [vmem:[#allocation4 + $0x4] sm:$0xf]
    %v58 = vld [vmem:[#allocation4 + $0x8] sm:$0xf]
    %v59 = vld [vmem:[#allocation4 + $0xc] sm:$0xf]
    %v60 = vld [vmem:[#allocation4 + $0x10] sm:$0xf]
    %v61 = vld [vmem:[#allocation4 + $0x14] sm:$0xf]
    %v62 = vld [vmem:[#allocation4 + $0x18] sm:$0xf]
    %v63 = vld [vmem:[#allocation4 + $0x1c] sm:$0xf]
    %v64 = vld [vmem:[#allocation4 + $0x20] sm:$0xf]
    %v65 = vld [vmem:[#allocation4 + $0x24] sm:$0xf]
    %v66 = vld [vmem:[#allocation4 + $0x28] sm:$0xf]
    %v67 = vld [vmem:[#allocation4 + $0x2c] sm:$0xf]
    %v68 = vld [vmem:[#allocation4 + $0x30] sm:$0xf]
    %v69 = vld [vmem:[#allocation4 + $0x34] sm:$0xf]
    %v70 = vld [vmem:[#allocation4 + $0x38] sm:$0xf]
    %v71 = vld [vmem:[#allocation4 + $0x3c] sm:$0xf]
    %v88 = vunpack.c.l.b16 %v40
    %v89 = vunpack.c.l.b16 %v41
    %v90 = vunpack.c.l.b16 %v42
    %v91 = vunpack.c.l.b16 %v43
    %v92 = vunpack.c.l.b16 %v44
    %v93 = vunpack.c.l.b16 %v45
    %v94 = vunpack.c.l.b16 %v46
    %v95 = vunpack.c.l.b16 %v47
    %v96 = vunpack.c.l.b16 %v48
    %v97 = vunpack.c.l.b16 %v49
    %v98 = vunpack.c.l.b16 %v50
    %v99 = vunpack.c.l.b16 %v51
    %v100 = vunpack.c.l.b16 %v52
    %v101 = vunpack.c.l.b16 %v53
    %v102 = vunpack.c.l.b16 %v54
    %v103 = vunpack.c.l.b16 %v55
    %v104 = vpack.c.b16 %v89, %v88
    %v105 = vpack.c.b16 %v91, %v90
    %v106 = vpack.c.b16 %v93, %v92
    %v107 = vpack.c.b16 %v95, %v94
    %v108 = vpack.c.b16 %v97, %v96
    %v109 = vpack.c.b16 %v99, %v98
    %v110 = vpack.c.b16 %v101, %v100
    %v111 = vpack.c.b16 %v103, %v102
    %v136 = vunpack.c.l.b16 %v56
    %v137 = vunpack.c.l.b16 %v57
    %v138 = vunpack.c.l.b16 %v58
    %v139 = vunpack.c.l.b16 %v59
    %v140 = vunpack.c.l.b16 %v60
    %v141 = vunpack.c.l.b16 %v61
    %v142 = vunpack.c.l.b16 %v62
    %v143 = vunpack.c.l.b16 %v63
    %v144 = vunpack.c.l.b16 %v64
    %v145 = vunpack.c.l.b16 %v65
    %v146 = vunpack.c.l.b16 %v66
    %v147 = vunpack.c.l.b16 %v67
    %v148 = vunpack.c.l.b16 %v68
    %v149 = vunpack.c.l.b16 %v69
    %v150 = vunpack.c.l.b16 %v70
    %v151 = vunpack.c.l.b16 %v71
    %v152 = vpack.c.b16 %v137, %v136
    %v153 = vpack.c.b16 %v139, %v138
    %v154 = vpack.c.b16 %v141, %v140
    %v155 = vpack.c.b16 %v143, %v142
    %v156 = vpack.c.b16 %v145, %v144
    %v157 = vpack.c.b16 %v147, %v146
    %v158 = vpack.c.b16 %v149, %v148
    %v159 = vpack.c.b16 %v151, %v150
    %168 = vmatprep.subr.bf16.mxu0 0
    %169 = vmatpush1.bf16.msra.mxu0 %v152
    %170 = vmatprep.subr.bf16.mxu0 0
    %171 = vmatpush1.bf16.msra.mxu0 %v153
    %172 = vmatprep.subr.bf16.mxu0 0
    %173 = vmatpush1.bf16.msra.mxu0 %v154
    %174 = vmatprep.subr.bf16.mxu0 0
    %175 = vmatpush1.bf16.msra.mxu0 %v155
    %176 = vmatprep.subr.bf16.mxu0 0
    %177 = vmatpush1.bf16.msra.mxu0 %v156
    %178 = vmatprep.subr.bf16.mxu0 0
    %179 = vmatpush1.bf16.msra.mxu0 %v157
    %180 = vmatprep.subr.bf16.mxu0 0
    %181 = vmatpush1.bf16.msra.mxu0 %v158
    %182 = vmatprep.subr.bf16.mxu0 0
    %183 = vmatpush1.bf16.msra.mxu0 %v159
    %184 = vmatprep.subr.bf16.mxu0 0
    %185 = vmatpush1.bf16.msra.mxu0 0
    %186 = vmatprep.subr.bf16.mxu0 0
    %187 = vmatpush1.bf16.msra.mxu0 0
    %188 = vmatprep.subr.bf16.mxu0 0
    %189 = vmatpush1.bf16.msra.mxu0 0
    %190 = vmatprep.subr.bf16.mxu0 0
    %191 = vmatpush1.bf16.msra.mxu0 0
    %192 = vmatprep.subr.bf16.mxu0 0
    %193 = vmatpush1.bf16.msra.mxu0 0
    %194 = vmatprep.subr.bf16.mxu0 0
    %195 = vmatpush1.bf16.msra.mxu0 0
    %196 = vmatprep.subr.bf16.mxu0 0
    %197 = vmatpush1.bf16.msra.mxu0 0
    %198 = vmatprep.subr.bf16.mxu0 0
    %199 = vmatpush1.bf16.msra.mxu0 0
    %200 = vmatprep.mubr.bf16.mxu0 0
    %201 = vmatmul.mubr.bf16.gmra.mrb[0].mxu0 %v104
    %v202 = vpop.f32.mrb[0].mxu0
    %v203 = vadd.f32 0.0, %v202
    %v204 = vpop.f32.mrb[0].mxu0
    %v205 = vpop.f32.mrb[0].mxu0
    %v206 = vadd.f32 0.0, %v205
    %v207 = vpop.f32.mrb[0].mxu0
    %208 = vmatprep.mubr.bf16.mxu0 0
    %209 = vmatmul.mubr.bf16.gmra.mrb[0].mxu0 %v105
    %v210 = vpop.f32.mrb[0].mxu0
    %v211 = vadd.f32 0.0, %v210
    %v212 = vpop.f32.mrb[0].mxu0
    %v213 = vpop.f32.mrb[0].mxu0
    %v214 = vadd.f32 0.0, %v213
    %v215 = vpop.f32.mrb[0].mxu0
    %216 = vmatprep.mubr.bf16.mxu0 0
    %217 = vmatmul.mubr.bf16.gmra.mrb[0].mxu0 %v106
    %v218 = vpop.f32.mrb[0].mxu0
    %v219 = vadd.f32 0.0, %v218
    %v220 = vpop.f32.mrb[0].mxu0
    %v221 = vpop.f32.mrb[0].mxu0
    %v222 = vadd.f32 0.0, %v221
    %v223 = vpop.f32.mrb[0].mxu0
    %224 = vmatprep.mubr.bf16.mxu0 0
    %225 = vmatmul.mubr.bf16.gmra.mrb[0].mxu0 %v107
    %v226 = vpop.f32.mrb[0].mxu0
    %v227 = vadd.f32 0.0, %v226
    %v228 = vpop.f32.mrb[0].mxu0
    %v229 = vpop.f32.mrb[0].mxu0
    %v230 = vadd.f32 0.0, %v229
    %v231 = vpop.f32.mrb[0].mxu0
    %232 = vmatprep.mubr.bf16.mxu0 0
    %233 = vmatmul.mubr.bf16.gmra.mrb[0].mxu0 %v108
    %v234 = vpop.f32.mrb[0].mxu0
    %v235 = vadd.f32 0.0, %v234
    %v236 = vpop.f32.mrb[0].mxu0
    %v237 = vpop.f32.mrb[0].mxu0
    %v238 = vadd.f32 0.0, %v237
    %v239 = vpop.f32.mrb[0].mxu0
    %240 = vmatprep.mubr.bf16.mxu0 0
    %241 = vmatmul.mubr.bf16.gmra.mrb[0].mxu0 %v109
    %v242 = vpop.f32.mrb[0].mxu0
    %v243 = vadd.f32 0.0, %v242
    %v244 = vpop.f32.mrb[0].mxu0
    %v245 = vpop.f32.mrb[0].mxu0
    %v246 = vadd.f32 0.0, %v245
    %v247 = vpop.f32.mrb[0].mxu0
    %248 = vmatprep.mubr.bf16.mxu0 0
    %249 = vmatmul.mubr.bf16.gmra.mrb[0].mxu0 %v110
    %v250 = vpop.f32.mrb[0].mxu0
    %v251 = vadd.f32 0.0, %v250
    %v252 = vpop.f32.mrb[0].mxu0
    %v253 = vpop.f32.mrb[0].mxu0
    %v254 = vadd.f32 0.0, %v253
    %v255 = vpop.f32.mrb[0].mxu0
    %256 = vmatprep.mubr.bf16.mxu0 0
    %257 = vmatmul.mubr.bf16.gmra.mrb[0].mxu0 %v111
    %v258 = vpop.f32.mrb[0].mxu0
    %v259 = vadd.f32 0.0, %v258
    %v260 = vpop.f32.mrb[0].mxu0
    %v261 = vpop.f32.mrb[0].mxu0
    %v262 = vadd.f32 0.0, %v261
    %v263 = vpop.f32.mrb[0].mxu0
    %264 = vdwg.mxu0
    %v265 = vpack.c.bf16 %v206, %v203
    %v266 = vpack.c.bf16 %v214, %v211
    %v267 = vpack.c.bf16 %v222, %v219
    %v268 = vpack.c.bf16 %v230, %v227
    %v269 = vpack.c.bf16 %v238, %v235
    %v270 = vpack.c.bf16 %v246, %v243
    %v271 = vpack.c.bf16 %v254, %v251
    %v272 = vpack.c.bf16 %v262, %v259
    %v281 = vunpack.c.l.b16 %v265
    %v282 = vunpack.c.h.b16 %v265
    %v283 = vunpack.c.l.b16 %v266
    %v284 = vunpack.c.h.b16 %v266
    %v285 = vunpack.c.l.b16 %v267
    %v286 = vunpack.c.h.b16 %v267
    %v287 = vunpack.c.l.b16 %v268
    %v288 = vunpack.c.h.b16 %v268
    %v289 = vunpack.c.l.b16 %v269
    %v290 = vunpack.c.h.b16 %v269
    %v291 = vunpack.c.l.b16 %v270
    %v292 = vunpack.c.h.b16 %v270
    %v293 = vunpack.c.l.b16 %v271
    %v294 = vunpack.c.h.b16 %v271
    %v295 = vunpack.c.l.b16 %v272
    %v296 = vunpack.c.h.b16 %v272
    %v297 = vpack.c.b16 %v281, %v281
    %v298 = vpack.c.b16 %v282, %v282
    %v299 = vpack.c.b16 %v283, %v283
    %v300 = vpack.c.b16 %v284, %v284
    %v301 = vpack.c.b16 %v285, %v285
    %v302 = vpack.c.b16 %v286, %v286
    %v303 = vpack.c.b16 %v287, %v287
    %v304 = vpack.c.b16 %v288, %v288
    %v305 = vpack.c.b16 %v289, %v289
    %v306 = vpack.c.b16 %v290, %v290
    %v307 = vpack.c.b16 %v291, %v291
    %v308 = vpack.c.b16 %v292, %v292
    %v309 = vpack.c.b16 %v293, %v293
    %v310 = vpack.c.b16 %v294, %v294
    %v311 = vpack.c.b16 %v295, %v295
    %v312 = vpack.c.b16 %v296, %v296
    %329 = vst [vmem:[%s2] sm:$0xf] %v297
    %330 = vst [vmem:[%s2 + $0x4] sm:$0xf] %v298
    %331 = vst [vmem:[%s2 + $0x8] sm:$0xf] %v299
    %332 = vst [vmem:[%s2 + $0xc] sm:$0xf] %v300
    %333 = vst [vmem:[%s2 + $0x10] sm:$0xf] %v301
    %334 = vst [vmem:[%s2 + $0x14] sm:$0xf] %v302
    %335 = vst [vmem:[%s2 + $0x18] sm:$0xf] %v303
    %336 = vst [vmem:[%s2 + $0x1c] sm:$0xf] %v304
    %337 = vst [vmem:[%s2 + $0x20] sm:$0xf] %v305
    %338 = vst [vmem:[%s2 + $0x24] sm:$0xf] %v306
    %339 = vst [vmem:[%s2 + $0x28] sm:$0xf] %v307
    %340 = vst [vmem:[%s2 + $0x2c] sm:$0xf] %v308
    %341 = vst [vmem:[%s2 + $0x30] sm:$0xf] %v309
    %342 = vst [vmem:[%s2 + $0x34] sm:$0xf] %v310
    %343 = vst [vmem:[%s2 + $0x38] sm:$0xf] %v311
    %344 = vst [vmem:[%s2 + $0x3c] sm:$0xf] %v312
    // Predicated region
    $region18: #{gcn_forward.4} parent=1 // pred_check
      _
    $region19: #{gcn_forward.4} parent=1 // pred_check_branch
      %346 = sbr.rel (0) target = $region21
    $region20: #{gcn_forward.4} parent=1 // pred_region
      _
    $region21: #{gcn_forward.4} parent=1 // pred_fallthru
      _
    // Predicated region
    $region22: #{gcn_forward.4} parent=1 // pred_check
      _
    $region23: #{gcn_forward.4} parent=1 // pred_check_branch
      %348 = sbr.rel (0) target = $region25
    $region24: #{gcn_forward.4} parent=1 // pred_region
      _
    $region25: #{gcn_forward.4} parent=1 // pred_fallthru
      _
    %349 = vsyncpa [#allocation3], 1
    %350 = vsyncpa [#allocation5], 1

// kernel: gcn_forward.5
$region0: #{gcn_forward.5}
  #allocation0 [shape = 'u32[]', space=smem, size = 0x4, offset = 0x4, fixed_abs, tag = 'smem constant byte address 0x4 - core index']
  #allocation1 [shape = 'u32[144,128]{1,0:T(1,128)}', space=vmem, size = 0x12000, scoped, tag = 'internal scratch']
  #allocation2 [shape = 'f32[8,128]{1,0:T(8,128)}', space=vmem, size = 0x1000, scoped, tag = 'scratch operand']
  #allocation3 [shape = 's32[1]{0}', space=sflag, size = 0x4, scoped, tag = 'scoped memory for gcn_forward.5']
  #allocation4 [shape = 's32[1]{0:T(128)S(6)}', space=smem, size = 0x200, scoped, tag = 'prefetched SMEM operand 0']
  #allocation5 [shape = 's32[1]{0:T(128)S(6)}', space=smem, size = 0x200, scoped, tag = 'prefetched SMEM operand 1']
  %s0 = inlined_call_operand.<no memory space> [shape: s32[1], index: 0, kind: input, shape index: {}]
  %s1 = inlined_call_operand.<no memory space> [shape: s32[1], index: 1, kind: input, shape index: {}]
  %s2 = inlined_call_operand.vmem [shape: bf16[8,128], index: 2, kind: input, shape index: {}]
  %s3 = inlined_call_operand.vmem [shape: bf16[128,128], index: 3, kind: input, shape index: {}]
  %s4 = inlined_call_operand.vmem [shape: f32[1,128], index: 4, kind: input, shape index: {}]
  %s5 = inlined_call_operand.vmem [shape: bf16[8,128], index: 5, kind: output, shape index: {}]
  %s6 = sld [smem:[#allocation0]]
  $region34: #{gcn_forward.5} parent=0
    _
  %s8 = ssub.s32 1, %s6
  %s9 = scalar_select 0, %s8, %s6
  %10 = sst [smem:[#allocation4]] %s0
  %11 = sst [smem:[#allocation5]] %s1
  // Predicated region
  $region2: #{gcn_forward.5} parent=0 // pred_check
    _
  $region3: #{gcn_forward.5} parent=0 // pred_check_branch
    %13 = sbr.rel (0) target = $region5
  $region4: #{gcn_forward.5} parent=0 // pred_region
    %s14 = sadd.s32 0, 0
    %s15 = sld [smem:[#allocation4 + %s14]]
    %p16 = scmp.lt.s32.totalorder %s15, 0
    %s17 = scalar_select %p16, %s15, 0
    %s18 = smul.addr %s17, 4
    %s19 = scalar_lea.vmem %s2, %s18
    %s20 = sadd.s32 0, 0
    %s21 = sld [smem:[#allocation4 + %s20]]
  $region5: #{gcn_forward.5} parent=0 // pred_fallthru
    _
  // Predicated region
  $region6: #{gcn_forward.5} parent=0 // pred_check
    _
  $region7: #{gcn_forward.5} parent=0 // pred_check_branch
    %23 = sbr.rel (0) target = $region9
  $region8: #{gcn_forward.5} parent=0 // pred_region
    _
  $region9: #{gcn_forward.5} parent=0 // pred_fallthru
    _
  // Predicated region
  $region10: #{gcn_forward.5} parent=0 // pred_check
    _
  $region11: #{gcn_forward.5} parent=0 // pred_check_branch
    %25 = sbr.rel (0) target = $region13
  $region12: #{gcn_forward.5} parent=0 // pred_region
    _
  $region13: #{gcn_forward.5} parent=0 // pred_fallthru
    _
  %s26 = sadd.s32 0, 0
  %s27 = sld [smem:[#allocation4 + %s26]]
  %p28 = scmp.lt.s32.totalorder %s27, 0
  %s29 = scalar_select %p28, %s27, 0
  %s30 = smul.addr %s29, 4
  %s31 = scalar_lea.vmem %s2, %s30
  %s32 = sadd.s32 0, 0
  %s33 = sld [smem:[#allocation4 + %s32]]
  %p34 = scmp.lt.s32.totalorder %s33, 0
  %s35 = scalar_select %p34, %s33, 0
  %s36 = smul.addr %s35, 4
  %s37 = scalar_lea.vmem %s2, %s36
  %s38 = sadd.s32 0, 0
  %s39 = sld [smem:[#allocation4 + %s38]]
  %p41 = scmp.eq.s32.totalorder 0, 0
  // Predicated region
  $region14: #{gcn_forward.5} parent=0 // pred_check
    %p42 = pneg %p41
  $region15: #{gcn_forward.5} parent=0 // pred_check_branch
    %44 = sbr.rel (%p42) target = $region17
  $region16: #{gcn_forward.5} parent=0 // pred_region
    %45 = vst [vmem:[#allocation2] sm:$0xff] 0.0
  $region17: #{gcn_forward.5} parent=0 // pred_fallthru
    _
  %s46 = sld [smem:[#allocation5]]
  %p47 = scmp.lt.s32.totalorder 0, %s46
  // Predicated region
  $region18: #{gcn_forward.5} parent=0 // pred_check
    %p48 = pneg %p47
  $region19: #{gcn_forward.5} parent=0 // pred_check_branch
    %50 = sbr.rel (%p48) target = $region21
  $region20: #{gcn_forward.5} parent=0 // pred_region
    %s51 = sadd.s32 0, 0
    %s52 = sld [smem:[#allocation4 + %s51]]
    %s53 = smul.u32 %s52, 128
    %s54 = sshra.s32 %s53, 3
    %s55 = sand.u32 %s53, 7
    %s56 = smul.addr %s54, 4
    %s57 = scalar_lea.vmem %s3, %s56
    %v58 = vld [vmem:[%s57] sm:$0xf]
    %v59 = vld [vmem:[%s57 + $0x4] sm:$0xf]
    %v60 = vld [vmem:[%s57 + $0x8] sm:$0xf]
    %v61 = vld [vmem:[%s57 + $0xc] sm:$0xf]
    %v62 = vld [vmem:[%s57 + $0x10] sm:$0xf]
    %v63 = vld [vmem:[%s57 + $0x14] sm:$0xf]
    %v64 = vld [vmem:[%s57 + $0x18] sm:$0xf]
    %v65 = vld [vmem:[%s57 + $0x1c] sm:$0xf]
    %v66 = vld [vmem:[%s57 + $0x20] sm:$0xf]
    %v67 = vld [vmem:[%s57 + $0x24] sm:$0xf]
    %v68 = vld [vmem:[%s57 + $0x28] sm:$0xf]
    %v69 = vld [vmem:[%s57 + $0x2c] sm:$0xf]
    %v70 = vld [vmem:[%s57 + $0x30] sm:$0xf]
    %v71 = vld [vmem:[%s57 + $0x34] sm:$0xf]
    %v72 = vld [vmem:[%s57 + $0x38] sm:$0xf]
    %v73 = vld [vmem:[%s57 + $0x3c] sm:$0xf]
    %v74 = vld [vmem:[#allocation2] sm:$0xff]
    %v75 = vld [vmem:[%s37] sm:$0xf]
    %v92 = vunpack.c.l.b16 %v58
    %v93 = vunpack.c.l.b16 %v59
    %v94 = vunpack.c.l.b16 %v60
    %v95 = vunpack.c.l.b16 %v61
    %v96 = vunpack.c.l.b16 %v62
    %v97 = vunpack.c.l.b16 %v63
    %v98 = vunpack.c.l.b16 %v64
    %v99 = vunpack.c.l.b16 %v65
    %v100 = vunpack.c.l.b16 %v66
    %v101 = vunpack.c.l.b16 %v67
    %v102 = vunpack.c.l.b16 %v68
    %v103 = vunpack.c.l.b16 %v69
    %v104 = vunpack.c.l.b16 %v70
    %v105 = vunpack.c.l.b16 %v71
    %v106 = vunpack.c.l.b16 %v72
    %v107 = vunpack.c.l.b16 %v73
    %v108 = vpack.c.b16 %v93, %v92
    %v109 = vpack.c.b16 %v95, %v94
    %v110 = vpack.c.b16 %v97, %v96
    %v111 = vpack.c.b16 %v99, %v98
    %v112 = vpack.c.b16 %v101, %v100
    %v113 = vpack.c.b16 %v103, %v102
    %v114 = vpack.c.b16 %v105, %v104
    %v115 = vpack.c.b16 %v107, %v106
    %124 = vmatprep.subr.bf16.mxu0 0
    %125 = vmatpush1.bf16.msra.mxu0 %v108
    %126 = vmatprep.subr.bf16.mxu0 0
    %127 = vmatpush1.bf16.msra.mxu0 %v109
    %128 = vmatprep.subr.bf16.mxu0 0
    %129 = vmatpush1.bf16.msra.mxu0 %v110
    %130 = vmatprep.subr.bf16.mxu0 0
    %131 = vmatpush1.bf16.msra.mxu0 %v111
    %132 = vmatprep.subr.bf16.mxu0 0
    %133 = vmatpush1.bf16.msra.mxu0 %v112
    %134 = vmatprep.subr.bf16.mxu0 0
    %135 = vmatpush1.bf16.msra.mxu0 %v113
    %136 = vmatprep.subr.bf16.mxu0 0
    %137 = vmatpush1.bf16.msra.mxu0 %v114
    %138 = vmatprep.subr.bf16.mxu0 0
    %139 = vmatpush1.bf16.msra.mxu0 %v115
    %140 = vmatprep.subr.bf16.mxu0 0
    %141 = vmatpush1.bf16.msra.mxu0 0
    %142 = vmatprep.subr.bf16.mxu0 0
    %143 = vmatpush1.bf16.msra.mxu0 0
    %144 = vmatprep.subr.bf16.mxu0 0
    %145 = vmatpush1.bf16.msra.mxu0 0
    %146 = vmatprep.subr.bf16.mxu0 0
    %147 = vmatpush1.bf16.msra.mxu0 0
    %148 = vmatprep.subr.bf16.mxu0 0
    %149 = vmatpush1.bf16.msra.mxu0 0
    %150 = vmatprep.subr.bf16.mxu0 0
    %151 = vmatpush1.bf16.msra.mxu0 0
    %152 = vmatprep.subr.bf16.mxu0 0
    %153 = vmatpush1.bf16.msra.mxu0 0
    %154 = vmatprep.subr.bf16.mxu0 0
    %155 = vmatpush1.bf16.msra.mxu0 0
    %156 = vmatprep.mubr.bf16.mxu0 0
    %157 = vmatmul.mubr.bf16.gmra.mrb[0].mxu0 %v75
    %v158 = vpop.f32.mrb[0].mxu0
    %v159 = vadd.f32 0.0, %v158
    %v160 = vpop.f32.mrb[0].mxu0
    %v161 = vpop.f32.mrb[0].mxu0
    %v162 = vpop.f32.mrb[0].mxu0
    %163 = vdwg.mxu0
    %v164 = vadd.f32 %v74, %v159
    %165 = vst [vmem:[#allocation2] sm:$0xff] %v164
  $region21: #{gcn_forward.5} parent=0 // pred_fallthru
    _
  // Predicated region
  $region22: #{gcn_forward.5} parent=0 // pred_check
    %p166 = pneg %p41
  $region23: #{gcn_forward.5} parent=0 // pred_check_branch
    %168 = sbr.rel (%p166) target = $region25
  $region24: #{gcn_forward.5} parent=0 // pred_region
    %v169 = vld [vmem:[#allocation2] sm:$0xff]
    %v170 = vld [vmem:[%s4] sm:$0x1]
    %v172 = vlaneseq
    %v173 = vshrl.u32 %v172, 7
    %v174 = vsub.s32 0, %v173
    %v175 = vrot.slane %v170, %v174
    %v177 = vadd.f32 %v169, %v175
    %v178 = vmax.f32 %v177, 0.0
    %v179 = vpack.c.bf16 %v178, %v178
    %180 = vst [vmem:[%s5] sm:$0xf] %v179
  $region25: #{gcn_forward.5} parent=0 // pred_fallthru
    _
  // Predicated region
  $region26: #{gcn_forward.5} parent=0 // pred_check
    _
  $region27: #{gcn_forward.5} parent=0 // pred_check_branch
    %182 = sbr.rel (0) target = $region29
  $region28: #{gcn_forward.5} parent=0 // pred_region
    _
  $region29: #{gcn_forward.5} parent=0 // pred_fallthru
    _
  // Predicated region
  $region30: #{gcn_forward.5} parent=0 // pred_check
    _
  $region31: #{gcn_forward.5} parent=0 // pred_check_branch
    %184 = sbr.rel (0) target = $region33
  $region32: #{gcn_forward.5} parent=0 // pred_region
    _
  $region33: #{gcn_forward.5} parent=0 // pred_fallthru
    _

// kernel: gcn_forward.7
$region0: #{gcn_forward.7}
  #allocation0 [shape = 'u32[]', space=smem, size = 0x4, offset = 0x4, fixed_abs, tag = 'smem constant byte address 0x4 - core index']
  #allocation1 [shape = 'u32[144,128]{1,0:T(1,128)}', space=vmem, size = 0x12000, scoped, tag = 'internal scratch']
  #allocation2 [shape = 'f32[8,128]{1,0:T(8,128)}', space=vmem, size = 0x1000, scoped, tag = 'scratch operand']
  #allocation3 [shape = 's32[1]{0}', space=sflag, size = 0x4, scoped, tag = 'scoped memory for gcn_forward.7']
  #allocation4 [shape = 's32[1]{0:T(128)S(6)}', space=smem, size = 0x200, scoped, tag = 'prefetched SMEM operand 0']
  #allocation5 [shape = 's32[1]{0:T(128)S(6)}', space=smem, size = 0x200, scoped, tag = 'prefetched SMEM operand 1']
  %s0 = inlined_call_operand.<no memory space> [shape: s32[1], index: 0, kind: input, shape index: {}]
  %s1 = inlined_call_operand.<no memory space> [shape: s32[1], index: 1, kind: input, shape index: {}]
  %s2 = inlined_call_operand.vmem [shape: bf16[8,128], index: 2, kind: input, shape index: {}]
  %s3 = inlined_call_operand.vmem [shape: bf16[128,128], index: 3, kind: input, shape index: {}]
  %s4 = inlined_call_operand.vmem [shape: f32[1,128], index: 4, kind: input, shape index: {}]
  %s5 = inlined_call_operand.hbm [shape: f32[8,128], index: 5, kind: output, shape index: {}]
  %s6 = sld [smem:[#allocation0]]
  $region34: #{gcn_forward.7} parent=0
    _
  %s8 = ssub.s32 1, %s6
  %s9 = scalar_select 0, %s8, %s6
  %10 = sst [smem:[#allocation4]] %s0
  %11 = sst [smem:[#allocation5]] %s1
  $region1: #{gcn_forward.7} parent=0
    #allocation6 [shape = 'u8[4096]{0}', space=vmem, size = 0x1000, scoped, tag = 'output window, operand 0, single buffered']
    #allocation7 [shape = 's32[1]{0}', space=sflag, size = 0x4, scoped, tag = 'scoped memory for gcn_forward.7']
    %12 = vsyncpa [#allocation7], 0
    // Predicated region
    $region2: #{gcn_forward.7} parent=1 // pred_check
      _
    $region3: #{gcn_forward.7} parent=1 // pred_check_branch
      %14 = sbr.rel (0) target = $region5
    $region4: #{gcn_forward.7} parent=1 // pred_region
      %s15 = sadd.s32 0, 0
      %s16 = sld [smem:[#allocation4 + %s15]]
      %p17 = scmp.lt.s32.totalorder %s16, 0
      %s18 = scalar_select %p17, %s16, 0
      %s19 = smul.addr %s18, 4
      %s20 = scalar_lea.vmem %s2, %s19
      %s21 = sadd.s32 0, 0
      %s22 = sld [smem:[#allocation4 + %s21]]
    $region5: #{gcn_forward.7} parent=1 // pred_fallthru
      _
    // Predicated region
    $region6: #{gcn_forward.7} parent=1 // pred_check
      _
    $region7: #{gcn_forward.7} parent=1 // pred_check_branch
      %24 = sbr.rel (0) target = $region9
    $region8: #{gcn_forward.7} parent=1 // pred_region
      _
    $region9: #{gcn_forward.7} parent=1 // pred_fallthru
      _
    // Predicated region
    $region10: #{gcn_forward.7} parent=1 // pred_check
      _
    $region11: #{gcn_forward.7} parent=1 // pred_check_branch
      %26 = sbr.rel (0) target = $region13
    $region12: #{gcn_forward.7} parent=1 // pred_region
      _
    $region13: #{gcn_forward.7} parent=1 // pred_fallthru
      _
    %s27 = sadd.s32 0, 0
    %s28 = sld [smem:[#allocation4 + %s27]]
    %p29 = scmp.lt.s32.totalorder %s28, 0
    %s30 = scalar_select %p29, %s28, 0
    %s31 = smul.addr %s30, 4
    %s32 = scalar_lea.vmem %s2, %s31
    %s33 = sadd.s32 0, 0
    %s34 = sld [smem:[#allocation4 + %s33]]
    %p35 = scmp.lt.s32.totalorder %s34, 0
    %s36 = scalar_select %p35, %s34, 0
    %s37 = smul.addr %s36, 4
    %s38 = scalar_lea.vmem %s2, %s37
    %s39 = sadd.s32 0, 0
    %s40 = sld [smem:[#allocation4 + %s39]]
    %p42 = scmp.eq.s32.totalorder 0, 0
    // Predicated region
    $region14: #{gcn_forward.7} parent=1 // pred_check
      %p43 = pneg %p42
    $region15: #{gcn_forward.7} parent=1 // pred_check_branch
      %45 = sbr.rel (%p43) target = $region17
    $region16: #{gcn_forward.7} parent=1 // pred_region
      %46 = vst [vmem:[#allocation2] sm:$0xff] 0.0
    $region17: #{gcn_forward.7} parent=1 // pred_fallthru
      _
    %s47 = sld [smem:[#allocation5]]
    %p48 = scmp.lt.s32.totalorder 0, %s47
    // Predicated region
    $region18: #{gcn_forward.7} parent=1 // pred_check
      %p49 = pneg %p48
    $region19: #{gcn_forward.7} parent=1 // pred_check_branch
      %51 = sbr.rel (%p49) target = $region21
    $region20: #{gcn_forward.7} parent=1 // pred_region
      %s52 = sadd.s32 0, 0
      %s53 = sld [smem:[#allocation4 + %s52]]
      %s54 = smul.u32 %s53, 128
      %s55 = sshra.s32 %s54, 3
      %s56 = sand.u32 %s54, 7
      %s57 = smul.addr %s55, 4
      %s58 = scalar_lea.vmem %s3, %s57
      %v59 = vld [vmem:[%s58] sm:$0xf]
      %v60 = vld [vmem:[%s58 + $0x4] sm:$0xf]
      %v61 = vld [vmem:[%s58 + $0x8] sm:$0xf]
      %v62 = vld [vmem:[%s58 + $0xc] sm:$0xf]
      %v63 = vld [vmem:[%s58 + $0x10] sm:$0xf]
      %v64 = vld [vmem:[%s58 + $0x14] sm:$0xf]
      %v65 = vld [vmem:[%s58 + $0x18] sm:$0xf]
      %v66 = vld [vmem:[%s58 + $0x1c] sm:$0xf]
      %v67 = vld [vmem:[%s58 + $0x20] sm:$0xf]
      %v68 = vld [vmem:[%s58 + $0x24] sm:$0xf]
      %v69 = vld [vmem:[%s58 + $0x28] sm:$0xf]
      %v70 = vld [vmem:[%s58 + $0x2c] sm:$0xf]
      %v71 = vld [vmem:[%s58 + $0x30] sm:$0xf]
      %v72 = vld [vmem:[%s58 + $0x34] sm:$0xf]
      %v73 = vld [vmem:[%s58 + $0x38] sm:$0xf]
      %v74 = vld [vmem:[%s58 + $0x3c] sm:$0xf]
      %v75 = vld [vmem:[#allocation2] sm:$0xff]
      %v76 = vld [vmem:[%s38] sm:$0xf]
      %v93 = vunpack.c.l.b16 %v59
      %v94 = vunpack.c.l.b16 %v60
      %v95 = vunpack.c.l.b16 %v61
      %v96 = vunpack.c.l.b16 %v62
      %v97 = vunpack.c.l.b16 %v63
      %v98 = vunpack.c.l.b16 %v64
      %v99 = vunpack.c.l.b16 %v65
      %v100 = vunpack.c.l.b16 %v66
      %v101 = vunpack.c.l.b16 %v67
      %v102 = vunpack.c.l.b16 %v68
      %v103 = vunpack.c.l.b16 %v69
      %v104 = vunpack.c.l.b16 %v70
      %v105 = vunpack.c.l.b16 %v71
      %v106 = vunpack.c.l.b16 %v72
      %v107 = vunpack.c.l.b16 %v73
      %v108 = vunpack.c.l.b16 %v74
      %v109 = vpack.c.b16 %v94, %v93
      %v110 = vpack.c.b16 %v96, %v95
      %v111 = vpack.c.b16 %v98, %v97
      %v112 = vpack.c.b16 %v100, %v99
      %v113 = vpack.c.b16 %v102, %v101
      %v114 = vpack.c.b16 %v104, %v103
      %v115 = vpack.c.b16 %v106, %v105
      %v116 = vpack.c.b16 %v108, %v107
      %125 = vmatprep.subr.bf16.mxu0 0
      %126 = vmatpush1.bf16.msra.mxu0 %v109
      %127 = vmatprep.subr.bf16.mxu0 0
      %128 = vmatpush1.bf16.msra.mxu0 %v110
      %129 = vmatprep.subr.bf16.mxu0 0
      %130 = vmatpush1.bf16.msra.mxu0 %v111
      %131 = vmatprep.subr.bf16.mxu0 0
      %132 = vmatpush1.bf16.msra.mxu0 %v112
      %133 = vmatprep.subr.bf16.mxu0 0
      %134 = vmatpush1.bf16.msra.mxu0 %v113
      %135 = vmatprep.subr.bf16.mxu0 0
      %136 = vmatpush1.bf16.msra.mxu0 %v114
      %137 = vmatprep.subr.bf16.mxu0 0
      %138 = vmatpush1.bf16.msra.mxu0 %v115
      %139 = vmatprep.subr.bf16.mxu0 0
      %140 = vmatpush1.bf16.msra.mxu0 %v116
      %141 = vmatprep.subr.bf16.mxu0 0
      %142 = vmatpush1.bf16.msra.mxu0 0
      %143 = vmatprep.subr.bf16.mxu0 0
      %144 = vmatpush1.bf16.msra.mxu0 0
      %145 = vmatprep.subr.bf16.mxu0 0
      %146 = vmatpush1.bf16.msra.mxu0 0
      %147 = vmatprep.subr.bf16.mxu0 0
      %148 = vmatpush1.bf16.msra.mxu0 0
      %149 = vmatprep.subr.bf16.mxu0 0
      %150 = vmatpush1.bf16.msra.mxu0 0
      %151 = vmatprep.subr.bf16.mxu0 0
      %152 = vmatpush1.bf16.msra.mxu0 0
      %153 = vmatprep.subr.bf16.mxu0 0
      %154 = vmatpush1.bf16.msra.mxu0 0
      %155 = vmatprep.subr.bf16.mxu0 0
      %156 = vmatpush1.bf16.msra.mxu0 0
      %157 = vmatprep.mubr.bf16.mxu0 0
      %158 = vmatmul.mubr.bf16.gmra.mrb[0].mxu0 %v76
      %v159 = vpop.f32.mrb[0].mxu0
      %v160 = vadd.f32 0.0, %v159
      %v161 = vpop.f32.mrb[0].mxu0
      %v162 = vpop.f32.mrb[0].mxu0
      %v163 = vpop.f32.mrb[0].mxu0
      %164 = vdwg.mxu0
      %v165 = vadd.f32 %v75, %v160
      %166 = vst [vmem:[#allocation2] sm:$0xff] %v165
    $region21: #{gcn_forward.7} parent=1 // pred_fallthru
      _
    // Predicated region
    $region22: #{gcn_forward.7} parent=1 // pred_check
      %p167 = pneg %p42
    $region23: #{gcn_forward.7} parent=1 // pred_check_branch
      %169 = sbr.rel (%p167) target = $region25
    $region24: #{gcn_forward.7} parent=1 // pred_region
      %v170 = vld [vmem:[#allocation2] sm:$0xff]
      %v171 = vld [vmem:[%s4] sm:$0x1]
      %v173 = vlaneseq
      %v174 = vshrl.u32 %v173, 7
      %v175 = vsub.s32 0, %v174
      %v176 = vrot.slane %v171, %v175
      %v178 = vadd.f32 %v170, %v176
      %179 = vmax.xlane.f32.xlu0 %v178
      %v180 = vpop.xlane.xlu0 %179
      %v181 = vsub.f32 %v178, %v180
      %v182 = vmul.f32 %v181, 1.442695
      %v183 = vpow.pop %v182
      %184 = vadd.xlane.f32.xlu0 %v183
      %v185 = vpop.xlane.xlu0 %184
      %v186 = vlog2.pop %v185
      %v187 = vmul.f32 %v186, 0.6931472
      %v188 = vsub.f32 %v181, %v187
      %189 = vst [vmem:[#allocation6] sm:$0xff] %v188
    $region25: #{gcn_forward.7} parent=1 // pred_fallthru
      _
    // Predicated region
    $region26: #{gcn_forward.7} parent=1 // pred_check
      _
    $region27: #{gcn_forward.7} parent=1 // pred_check_branch
      %191 = sbr.rel (0) target = $region29
    $region28: #{gcn_forward.7} parent=1 // pred_region
      %s193 = ssub.s32 128, 128
      %194 = vsyncadd [#allocation7], %s193
      %s196 = sshll.u32 [#allocation6], 4
      %s197 = int_to_ptr.vmem [resolvable:$true] %s196
      %199 = dma.vmem_to_hbm [thread:$0]  %s197, 128, %s5, [#allocation7]
    $region29: #{gcn_forward.7} parent=1 // pred_fallthru
      _
    // Predicated region
    $region30: #{gcn_forward.7} parent=1 // pred_check
      _
    $region31: #{gcn_forward.7} parent=1 // pred_check_branch
      %201 = sbr.rel (0) target = $region33
    $region32: #{gcn_forward.7} parent=1 // pred_region
      %202 = dma.done [#allocation7], 128
    $region33: #{gcn_forward.7} parent=1 // pred_fallthru
      _
    %203 = vsyncpa [#allocation7], 1

</llo_original>
